<compile_context>
chip_gen: v5e
topology: v5e:2x2
jax: 0.10.0
libtpu: 0.0.40
codegen_flags: <defaults>
</compile_context>

<pallas_src>
import functools

import jax
import jax.numpy as jnp
from jax.experimental import pallas as pl
from jax.experimental.pallas import tpu as pltpu

HIDDEN_DIM = 64


def _cdiv(a, b):
    return -(-a // b)


def _round_up(x, m):
    return _cdiv(x, m) * m


# ---------------------------------------------------------------------------
# Kernels
# ---------------------------------------------------------------------------

def _mlp_trunk(state_ref, w1_ref, b1_ref, w2_ref, b2_ref, w3_ref):
    """relu(fc1) -> relu(fc2) -> fc3 pre-activation; f32 MXU accumulation.

    If state/weights were cast to bf16 wrapper-side, layer 1 runs bf16 on the
    MXU; layers 2/3 promote the (small, VMEM-resident) weights to f32 — the
    kernel is nowhere near MXU-bound, the bf16 win is the halved state DMA.
    """
    h = jnp.dot(state_ref[...], w1_ref[...], preferred_element_type=jnp.float32)
    h = jnp.maximum(h + b1_ref[...], 0.0)
    h = jnp.dot(h, w2_ref[...], preferred_element_type=jnp.float32)
    h = jnp.maximum(h + b2_ref[...], 0.0)
    return jnp.dot(h, w3_ref[...], preferred_element_type=jnp.float32)


def _policy_kernel_dense(state_ref, w1_ref, b1_ref, w2_ref, b2_ref, w3_ref,
                         b3_ref, out_ref, *, fold):
    """Lane-dense epilogue: pack `fold` consecutive batch rows into one
    128-wide output row, then bias + tanh + store on fully packed vregs."""
    h = _mlp_trunk(state_ref, w1_ref, b1_ref, w2_ref, b2_ref, w3_ref)
    tile_b, action_dim = h.shape
    h = h.reshape(tile_b // fold, fold * action_dim)        # (tile_b//fold, 128)
    out_ref[...] = jnp.tanh(h + b3_ref[...]).astype(out_ref.dtype)


def _policy_kernel_plain(state_ref, w1_ref, b1_ref, w2_ref, b2_ref, w3_ref,
                         b3_ref, out_ref):
    """Fallback epilogue: narrow (tile_b, action_dim) output (masked stores)."""
    h = _mlp_trunk(state_ref, w1_ref, b1_ref, w2_ref, b2_ref, w3_ref)
    out_ref[...] = jnp.tanh(h + b3_ref[...]).astype(out_ref.dtype)


# ---------------------------------------------------------------------------
# pallas_call wrapper
# ---------------------------------------------------------------------------

def _choose_tile_b(B, tile_b_max):
    """Batch tile: multiple of 128 (lane-dense pack + unmasked stores).
    For B > 128, guarantee >= 2 grid steps so the 'parallel' batch axis can
    shard across the two v7x TensorCores; otherwise one big tile."""
    if B <= 128:
        return 128
    steps = max(2, _cdiv(B, tile_b_max))
    return min(tile_b_max, _round_up(_cdiv(B, steps), 128))


def _forward_impl(state, w1, b1, w2, b2, w3, b3, *, tile_b, lane_dense):
    B, state_dim = state.shape
    hidden = w1.shape[1]
    action_dim = w3.shape[1]
    num_blocks = _cdiv(B, tile_b)
    b_full = num_blocks * tile_b          # grid coverage; extra rows sliced off

    in_specs = [
        # state: streamed per batch tile (double-buffered by Pallas); the last
        # block may be ragged — OOB rows are unspecified, row-independent, and
        # discarded by the [:B] slice below.  No jnp.pad copy of the input.
        pl.BlockSpec((tile_b, state_dim), lambda i: (i, 0)),
        # weights/biases: pinned VMEM-resident (same block every grid step).
        pl.BlockSpec((state_dim, hidden), lambda i: (0, 0)),
        pl.BlockSpec((1, hidden), lambda i: (0, 0)),
        pl.BlockSpec((hidden, hidden), lambda i: (0, 0)),
        pl.BlockSpec((1, hidden), lambda i: (0, 0)),
        pl.BlockSpec((hidden, action_dim), lambda i: (0, 0)),
    ]

    cost = pl.CostEstimate(
        flops=2 * B * (state_dim * hidden + hidden * hidden + hidden * action_dim),
        transcendentals=B * action_dim,
        bytes_accessed=4 * (B * (state_dim + action_dim)
                            + state_dim * hidden + hidden * hidden
                            + hidden * action_dim + 2 * hidden + action_dim),
    )
    cparams = pltpu.CompilerParams(
        dimension_semantics=("parallel",),
        vmem_limit_bytes=32 * 1024 * 1024,   # ample headroom, valid on v7x too
    )

    if lane_dense:
        fold = 128 // action_dim
        # Bias tiled to 128 lanes so the whole epilogue is lane-dense.
        b3_in = jnp.tile(b3.reshape(1, action_dim).astype(jnp.float32), (1, fold))
        out = pl.pallas_call(
            functools.partial(_policy_kernel_dense, fold=fold),
            out_shape=jax.ShapeDtypeStruct((b_full // fold, 128), jnp.float32),
            grid=(num_blocks,),
            in_specs=in_specs + [pl.BlockSpec((1, 128), lambda i: (0, 0))],
            out_specs=pl.BlockSpec((tile_b // fold, 128), lambda i: (i, 0)),
            compiler_params=cparams,
            cost_estimate=cost,
        )(state, w1, b1, w2, b2, w3, b3_in)
        # Contiguous row-major unpack: (b_full//fold, 128) -> (b_full, action_dim).
        mean = out.reshape(b_full, action_dim)[:B]
    else:
        b3_in = b3.reshape(1, action_dim).astype(jnp.float32)
        out = pl.pallas_call(
            _policy_kernel_plain,
            out_shape=jax.ShapeDtypeStruct((b_full, action_dim), jnp.float32),
            grid=(num_blocks,),
            in_specs=in_specs + [pl.BlockSpec((1, action_dim), lambda i: (0, 0))],
            out_specs=pl.BlockSpec((tile_b, action_dim), lambda i: (i, 0)),
            compiler_params=cparams,
            cost_estimate=cost,
        )(state, w1, b1, w2, b2, w3, b3_in)
        mean = out[:B]
    return mean


# One-time probe: does the in-kernel (tile_b, A) -> (tile_b//fold, 128) repack
# lower on this jaxlib/Mosaic?  If not, silently use the plain epilogue.
_DENSE_PROBE_CACHE = {}


def _dense_epilogue_supported(state_dim, hidden, action_dim):
    key = (state_dim, hidden, action_dim)
    if key not in _DENSE_PROBE_CACHE:
        try:
            z = jnp.zeros
            mean = _forward_impl(
                z((128, state_dim), jnp.float32),
                z((state_dim, hidden), jnp.float32), z((1, hidden), jnp.float32),
                z((hidden, hidden), jnp.float32), z((1, hidden), jnp.float32),
                z((hidden, action_dim), jnp.float32), z((1, action_dim), jnp.float32),
                tile_b=128, lane_dense=True)
            jax.block_until_ready(mean)
            _DENSE_PROBE_CACHE[key] = True
        except Exception:
            # TODO(synk): this Mosaic build cannot lower the lane-changing
            # repack; fall back to the narrow masked-store epilogue.
            _DENSE_PROBE_CACHE[key] = False
    return _DENSE_PROBE_CACHE[key]


def stable_policy_forward(state, params, *, tile_b_max=2048, lane_dense=None,
                          input_dtype=None):
    """Forward pass of StablePolicy.

    Returns (mean, std) where mean is (B, action_dim) and std is the
    (action_dim,) row — the parameters of torch.distributions.Normal(mean, std)
    (the distribution broadcasts std; no (B, action_dim) std tensor is built).

    input_dtype: optional wrapper-side cast of state/weights (e.g. jnp.bfloat16
    on v6e/v7x to halve state DMA).  Accumulation stays f32.
    """
    w1, b1 = params["w1"], params["b1"]
    w2, b2 = params["w2"], params["b2"]
    w3, b3 = params["w3"], params["b3"]
    if input_dtype is not None:
        state = state.astype(input_dtype)
        w1, w2, w3 = (w.astype(input_dtype) for w in (w1, w2, w3))

    B, _ = state.shape
    state_dim = state.shape[1]
    hidden = w1.shape[1]
    action_dim = w3.shape[1]

    tile_b = _choose_tile_b(B, tile_b_max)

    if lane_dense is None:
        lane_dense = (action_dim % 8 == 0 and 128 % action_dim == 0
                      and _dense_epilogue_supported(state_dim, hidden, action_dim))

    mean = _forward_impl(state, w1, b1, w2, b2, w3, b3,
                         tile_b=tile_b, lane_dense=lane_dense)

    # std depends only on log_std — computed outside the kernel, kept as a row.
    std = (jnp.exp(jnp.clip(params["log_std"].astype(jnp.float32), -5.0, 2.0))
           + 1e-6).reshape(-1)
    return mean, std


# ---------------------------------------------------------------------------
# Parameter init matching the PyTorch module
# ---------------------------------------------------------------------------

def init_params(key, state_dim, action_dim):
    """xavier_normal_ weights, nn.Linear-style uniform biases,
    log_std = -1.0 * ones(action_dim)."""
    k1, k2, k3, kb1, kb2, kb3 = jax.random.split(key, 6)

    def xavier_normal(k, fan_in, fan_out):
        std = jnp.sqrt(2.0 / (fan_in + fan_out))
        return std * jax.random.normal(k, (fan_in, fan_out), dtype=jnp.float32)

    def bias(k, fan_in, dim):
        bound = 1.0 / jnp.sqrt(fan_in)
        return jax.random.uniform(k, (1, dim), dtype=jnp.float32,
                                  minval=-bound, maxval=bound)

    return {
        "w1": xavier_normal(k1, state_dim, HIDDEN_DIM),
        "b1": bias(kb1, state_dim, HIDDEN_DIM),
        "w2": xavier_normal(k2, HIDDEN_DIM, HIDDEN_DIM),
        "b2": bias(kb2, HIDDEN_DIM, HIDDEN_DIM),
        "w3": xavier_normal(k3, HIDDEN_DIM, action_dim),
        "b3": bias(kb3, HIDDEN_DIM, action_dim),
        "log_std": jnp.full((1, action_dim), -1.0, dtype=jnp.float32),
    }


if __name__ == "__main__":
    B, STATE_DIM, ACTION_DIM = 2, 16, 8
    key = jax.random.PRNGKey(0)
    k_param, k_state, k_state2 = jax.random.split(key, 3)
    params = init_params(k_param, STATE_DIM, ACTION_DIM)
    state = jax.random.normal(k_state, (B, STATE_DIM), dtype=jnp.float32)

    def ref(state, p):
        x = jnp.maximum(state @ p["w1"] + p["b1"], 0.0)
        x = jnp.maximum(x @ p["w2"] + p["b2"], 0.0)
        m = jnp.tanh(x @ p["w3"] + p["b3"])
        s = (jnp.exp(jnp.clip(p["log_std"], -5.0, 2.0)) + 1e-6).reshape(-1)
        return m, s

    # Small batch (single grid step), f32 path — exact check.
    mean, std = stable_policy_forward(state, params)
    jax.block_until_ready((mean, std))
    m_ref, s_ref = ref(state, params)
    assert mean.shape == (B, ACTION_DIM)
    assert jnp.allclose(mean, m_ref, atol=1e-5), "mean mismatch (B=2, f32)"
    assert jnp.allclose(std, s_ref, atol=1e-6), "std mismatch"

    # Ragged multi-block batch (exercises >=2 parallel grid steps + masked
    # partial input block, no wrapper pad copy).
    B2 = 260
    state2 = jax.random.normal(k_state2, (B2, STATE_DIM), dtype=jnp.float32)
    mean2, _ = stable_policy_forward(state2, params)
    jax.block_until_ready(mean2)
    m_ref2, _ = ref(state2, params)
    assert mean2.shape == (B2, ACTION_DIM)
    assert jnp.allclose(mean2, m_ref2, atol=1e-5), "mean mismatch (B=260, f32)"

    # Optional bandwidth-saving bf16-in-HBM path (wrapper-side cast; f32 acc).
    mean_bf16, _ = stable_policy_forward(state, params, input_dtype=jnp.bfloat16)
    jax.block_until_ready(mean_bf16)
    assert jnp.allclose(mean_bf16, m_ref, atol=5e-2), "mean mismatch (bf16)"

    print("KERNEL_OK")
</pallas_src>

<mosaic_0001>
module attributes {stable_mosaic.version = 11 : i64} {
  func.func @_policy_kernel_dense(%arg0: i32, %arg1: memref<128x16xf32, #tpu.memory_space<vmem>>, %arg2: memref<16x64xf32, #tpu.memory_space<vmem>>, %arg3: memref<1x64xf32, #tpu.memory_space<vmem>>, %arg4: memref<64x64xf32, #tpu.memory_space<vmem>>, %arg5: memref<1x64xf32, #tpu.memory_space<vmem>>, %arg6: memref<64x8xf32, #tpu.memory_space<vmem>>, %arg7: memref<1x128xf32, #tpu.memory_space<vmem>>, %arg8: memref<8x128xf32, #tpu.memory_space<vmem>>) attributes {dimension_semantics = [#tpu.dimension_semantics<parallel>], iteration_bounds = array<i64: 1>, scalar_prefetch = 0 : i64, scratch_operands = 0 : i64, tpu.core_type = #tpu.core_type<tc>, window_params = [{transform_indices = @transform_0, window_bounds = array<i64: 128, 16>}, {pipeline_mode = #tpu.pipeline_mode<synchronous>, transform_indices = @transform_1, window_bounds = array<i64: 16, 64>}, {pipeline_mode = #tpu.pipeline_mode<synchronous>, transform_indices = @transform_2, window_bounds = array<i64: 1, 64>}, {pipeline_mode = #tpu.pipeline_mode<synchronous>, transform_indices = @transform_3, window_bounds = array<i64: 64, 64>}, {pipeline_mode = #tpu.pipeline_mode<synchronous>, transform_indices = @transform_4, window_bounds = array<i64: 1, 64>}, {pipeline_mode = #tpu.pipeline_mode<synchronous>, transform_indices = @transform_5, window_bounds = array<i64: 64, 8>}, {pipeline_mode = #tpu.pipeline_mode<synchronous>, transform_indices = @transform_6, window_bounds = array<i64: 1, 128>}, {transform_indices = @transform_7, window_bounds = array<i64: 8, 128>}]} {
    %c0 = arith.constant 0 : index
    %c0_0 = arith.constant 0 : index
    %0 = vector.load %arg1[%c0, %c0_0] : memref<128x16xf32, #tpu.memory_space<vmem>>, vector<128x16xf32>
    %c0_1 = arith.constant 0 : index
    %c0_2 = arith.constant 0 : index
    %1 = vector.load %arg2[%c0_1, %c0_2] : memref<16x64xf32, #tpu.memory_space<vmem>>, vector<16x64xf32>
    %cst = arith.constant dense<0.000000e+00> : vector<128x64xf32>
    %2 = tpu.matmul %0, %1, %cst {dimension_numbers = #tpu.dot_dimension_numbers<[1], [0], [0], [1], [0, 0, 1, 1], [], []>} : vector<128x16xf32>, vector<16x64xf32>, vector<128x64xf32> -> vector<128x64xf32>
    %c0_3 = arith.constant 0 : index
    %c0_4 = arith.constant 0 : index
    %3 = vector.load %arg3[%c0_3, %c0_4] : memref<1x64xf32, #tpu.memory_space<vmem>>, vector<1x64xf32>
    %4 = vector.broadcast %3 : vector<1x64xf32> to vector<128x64xf32>
    %5 = arith.addf %2, %4 : vector<128x64xf32>
    %cst_5 = arith.constant 0.000000e+00 : f32
    %6 = vector.broadcast %cst_5 : f32 to vector<128x64xf32>
    %7 = arith.maximumf %5, %6 : vector<128x64xf32>
    %c0_6 = arith.constant 0 : index
    %c0_7 = arith.constant 0 : index
    %8 = vector.load %arg4[%c0_6, %c0_7] : memref<64x64xf32, #tpu.memory_space<vmem>>, vector<64x64xf32>
    %cst_8 = arith.constant dense<0.000000e+00> : vector<128x64xf32>
    %9 = tpu.matmul %7, %8, %cst_8 {dimension_numbers = #tpu.dot_dimension_numbers<[1], [0], [0], [1], [0, 0, 1, 1], [], []>} : vector<128x64xf32>, vector<64x64xf32>, vector<128x64xf32> -> vector<128x64xf32>
    %c0_9 = arith.constant 0 : index
    %c0_10 = arith.constant 0 : index
    %10 = vector.load %arg5[%c0_9, %c0_10] : memref<1x64xf32, #tpu.memory_space<vmem>>, vector<1x64xf32>
    %11 = vector.broadcast %10 : vector<1x64xf32> to vector<128x64xf32>
    %12 = arith.addf %9, %11 : vector<128x64xf32>
    %cst_11 = arith.constant 0.000000e+00 : f32
    %13 = vector.broadcast %cst_11 : f32 to vector<128x64xf32>
    %14 = arith.maximumf %12, %13 : vector<128x64xf32>
    %c0_12 = arith.constant 0 : index
    %c0_13 = arith.constant 0 : index
    %15 = vector.load %arg6[%c0_12, %c0_13] : memref<64x8xf32, #tpu.memory_space<vmem>>, vector<64x8xf32>
    %cst_14 = arith.constant dense<0.000000e+00> : vector<128x8xf32>
    %16 = tpu.matmul %14, %15, %cst_14 {dimension_numbers = #tpu.dot_dimension_numbers<[1], [0], [0], [1], [0, 0, 1, 1], [], []>} : vector<128x64xf32>, vector<64x8xf32>, vector<128x8xf32> -> vector<128x8xf32>
    %17 = vector.shape_cast %16 : vector<128x8xf32> to vector<8x128xf32>
    %c0_15 = arith.constant 0 : index
    %c0_16 = arith.constant 0 : index
    %18 = vector.load %arg7[%c0_15, %c0_16] : memref<1x128xf32, #tpu.memory_space<vmem>>, vector<1x128xf32>
    %19 = vector.broadcast %18 : vector<1x128xf32> to vector<8x128xf32>
    %20 = arith.addf %17, %19 : vector<8x128xf32>
    %21 = math.tanh %20 : vector<8x128xf32>
    %c0_17 = arith.constant 0 : index
    %c0_18 = arith.constant 0 : index
    %22 = vector.load %arg8[%c0_17, %c0_18] : memref<8x128xf32, #tpu.memory_space<vmem>>, vector<8x128xf32>
    tpu.vector_store %arg8[%c0_17, %c0_18], %21 {strides = array<i32>} : memref<8x128xf32, #tpu.memory_space<vmem>>, vector<8x128xf32>,
    return
  }
  func.func @transform_0(%arg0: i32) -> (i32, i32) {
    %c0_i32 = arith.constant 0 : i32
    %c0_i32_0 = arith.constant 0 : i32
    return %arg0, %c0_i32 : i32, i32
  }
  func.func @transform_1(%arg0: i32) -> (i32, i32) {
    %c0_i32 = arith.constant 0 : i32
    %c0_i32_0 = arith.constant 0 : i32
    %c0_i32_1 = arith.constant 0 : i32
    return %c0_i32, %c0_i32_0 : i32, i32
  }
  func.func @transform_2(%arg0: i32) -> (i32, i32) {
    %c0_i32 = arith.constant 0 : i32
    %c0_i32_0 = arith.constant 0 : i32
    %c0_i32_1 = arith.constant 0 : i32
    return %c0_i32, %c0_i32_0 : i32, i32
  }
  func.func @transform_3(%arg0: i32) -> (i32, i32) {
    %c0_i32 = arith.constant 0 : i32
    %c0_i32_0 = arith.constant 0 : i32
    %c0_i32_1 = arith.constant 0 : i32
    return %c0_i32, %c0_i32_0 : i32, i32
  }
  func.func @transform_4(%arg0: i32) -> (i32, i32) {
    %c0_i32 = arith.constant 0 : i32
    %c0_i32_0 = arith.constant 0 : i32
    %c0_i32_1 = arith.constant 0 : i32
    return %c0_i32, %c0_i32_0 : i32, i32
  }
  func.func @transform_5(%arg0: i32) -> (i32, i32) {
    %c0_i32 = arith.constant 0 : i32
    %c0_i32_0 = arith.constant 0 : i32
    %c0_i32_1 = arith.constant 0 : i32
    return %c0_i32, %c0_i32_0 : i32, i32
  }
  func.func @transform_6(%arg0: i32) -> (i32, i32) {
    %c0_i32 = arith.constant 0 : i32
    %c0_i32_0 = arith.constant 0 : i32
    %c0_i32_1 = arith.constant 0 : i32
    return %c0_i32, %c0_i32_0 : i32, i32
  }
  func.func @transform_7(%arg0: i32) -> (i32, i32) {
    %c0_i32 = arith.constant 0 : i32
    %c0_i32_0 = arith.constant 0 : i32
    return %arg0, %c0_i32 : i32, i32
  }
}

module attributes {stable_mosaic.version = 11 : i64} {
  func.func @_policy_kernel_plain(%arg0: i32, %arg1: memref<128x16xf32, #tpu.memory_space<vmem>>, %arg2: memref<16x64xf32, #tpu.memory_space<vmem>>, %arg3: memref<1x64xf32, #tpu.memory_space<vmem>>, %arg4: memref<64x64xf32, #tpu.memory_space<vmem>>, %arg5: memref<1x64xf32, #tpu.memory_space<vmem>>, %arg6: memref<64x8xf32, #tpu.memory_space<vmem>>, %arg7: memref<1x8xf32, #tpu.memory_space<vmem>>, %arg8: memref<128x8xf32, #tpu.memory_space<vmem>>) attributes {dimension_semantics = [#tpu.dimension_semantics<parallel>], iteration_bounds = array<i64: 1>, scalar_prefetch = 0 : i64, scratch_operands = 0 : i64, tpu.core_type = #tpu.core_type<tc>, window_params = [{transform_indices = @transform_0, window_bounds = array<i64: 128, 16>}, {pipeline_mode = #tpu.pipeline_mode<synchronous>, transform_indices = @transform_1, window_bounds = array<i64: 16, 64>}, {pipeline_mode = #tpu.pipeline_mode<synchronous>, transform_indices = @transform_2, window_bounds = array<i64: 1, 64>}, {pipeline_mode = #tpu.pipeline_mode<synchronous>, transform_indices = @transform_3, window_bounds = array<i64: 64, 64>}, {pipeline_mode = #tpu.pipeline_mode<synchronous>, transform_indices = @transform_4, window_bounds = array<i64: 1, 64>}, {pipeline_mode = #tpu.pipeline_mode<synchronous>, transform_indices = @transform_5, window_bounds = array<i64: 64, 8>}, {pipeline_mode = #tpu.pipeline_mode<synchronous>, transform_indices = @transform_6, window_bounds = array<i64: 1, 8>}, {transform_indices = @transform_7, window_bounds = array<i64: 128, 8>}]} {
    %c0 = arith.constant 0 : index
    %c0_0 = arith.constant 0 : index
    %0 = vector.load %arg1[%c0, %c0_0] : memref<128x16xf32, #tpu.memory_space<vmem>>, vector<128x16xf32>
    %c0_1 = arith.constant 0 : index
    %c0_2 = arith.constant 0 : index
    %1 = vector.load %arg2[%c0_1, %c0_2] : memref<16x64xf32, #tpu.memory_space<vmem>>, vector<16x64xf32>
    %cst = arith.constant dense<0.000000e+00> : vector<128x64xf32>
    %2 = tpu.matmul %0, %1, %cst {dimension_numbers = #tpu.dot_dimension_numbers<[1], [0], [0], [1], [0, 0, 1, 1], [], []>} : vector<128x16xf32>, vector<16x64xf32>, vector<128x64xf32> -> vector<128x64xf32>
    %c0_3 = arith.constant 0 : index
    %c0_4 = arith.constant 0 : index
    %3 = vector.load %arg3[%c0_3, %c0_4] : memref<1x64xf32, #tpu.memory_space<vmem>>, vector<1x64xf32>
    %4 = vector.broadcast %3 : vector<1x64xf32> to vector<128x64xf32>
    %5 = arith.addf %2, %4 : vector<128x64xf32>
    %cst_5 = arith.constant 0.000000e+00 : f32
    %6 = vector.broadcast %cst_5 : f32 to vector<128x64xf32>
    %7 = arith.maximumf %5, %6 : vector<128x64xf32>
    %c0_6 = arith.constant 0 : index
    %c0_7 = arith.constant 0 : index
    %8 = vector.load %arg4[%c0_6, %c0_7] : memref<64x64xf32, #tpu.memory_space<vmem>>, vector<64x64xf32>
    %cst_8 = arith.constant dense<0.000000e+00> : vector<128x64xf32>
    %9 = tpu.matmul %7, %8, %cst_8 {dimension_numbers = #tpu.dot_dimension_numbers<[1], [0], [0], [1], [0, 0, 1, 1], [], []>} : vector<128x64xf32>, vector<64x64xf32>, vector<128x64xf32> -> vector<128x64xf32>
    %c0_9 = arith.constant 0 : index
    %c0_10 = arith.constant 0 : index
    %10 = vector.load %arg5[%c0_9, %c0_10] : memref<1x64xf32, #tpu.memory_space<vmem>>, vector<1x64xf32>
    %11 = vector.broadcast %10 : vector<1x64xf32> to vector<128x64xf32>
    %12 = arith.addf %9, %11 : vector<128x64xf32>
    %cst_11 = arith.constant 0.000000e+00 : f32
    %13 = vector.broadcast %cst_11 : f32 to vector<128x64xf32>
    %14 = arith.maximumf %12, %13 : vector<128x64xf32>
    %c0_12 = arith.constant 0 : index
    %c0_13 = arith.constant 0 : index
    %15 = vector.load %arg6[%c0_12, %c0_13] : memref<64x8xf32, #tpu.memory_space<vmem>>, vector<64x8xf32>
    %cst_14 = arith.constant dense<0.000000e+00> : vector<128x8xf32>
    %16 = tpu.matmul %14, %15, %cst_14 {dimension_numbers = #tpu.dot_dimension_numbers<[1], [0], [0], [1], [0, 0, 1, 1], [], []>} : vector<128x64xf32>, vector<64x8xf32>, vector<128x8xf32> -> vector<128x8xf32>
    %c0_15 = arith.constant 0 : index
    %c0_16 = arith.constant 0 : index
    %17 = vector.load %arg7[%c0_15, %c0_16] : memref<1x8xf32, #tpu.memory_space<vmem>>, vector<1x8xf32>
    %18 = vector.broadcast %17 : vector<1x8xf32> to vector<128x8xf32>
    %19 = arith.addf %16, %18 : vector<128x8xf32>
    %20 = math.tanh %19 : vector<128x8xf32>
    %c0_17 = arith.constant 0 : index
    %c0_18 = arith.constant 0 : index
    %21 = vector.load %arg8[%c0_17, %c0_18] : memref<128x8xf32, #tpu.memory_space<vmem>>, vector<128x8xf32>
    tpu.vector_store %arg8[%c0_17, %c0_18], %20 {strides = array<i32>} : memref<128x8xf32, #tpu.memory_space<vmem>>, vector<128x8xf32>,
    return
  }
  func.func @transform_0(%arg0: i32) -> (i32, i32) {
    %c0_i32 = arith.constant 0 : i32
    %c0_i32_0 = arith.constant 0 : i32
    return %arg0, %c0_i32 : i32, i32
  }
  func.func @transform_1(%arg0: i32) -> (i32, i32) {
    %c0_i32 = arith.constant 0 : i32
    %c0_i32_0 = arith.constant 0 : i32
    %c0_i32_1 = arith.constant 0 : i32
    return %c0_i32, %c0_i32_0 : i32, i32
  }
  func.func @transform_2(%arg0: i32) -> (i32, i32) {
    %c0_i32 = arith.constant 0 : i32
    %c0_i32_0 = arith.constant 0 : i32
    %c0_i32_1 = arith.constant 0 : i32
    return %c0_i32, %c0_i32_0 : i32, i32
  }
  func.func @transform_3(%arg0: i32) -> (i32, i32) {
    %c0_i32 = arith.constant 0 : i32
    %c0_i32_0 = arith.constant 0 : i32
    %c0_i32_1 = arith.constant 0 : i32
    return %c0_i32, %c0_i32_0 : i32, i32
  }
  func.func @transform_4(%arg0: i32) -> (i32, i32) {
    %c0_i32 = arith.constant 0 : i32
    %c0_i32_0 = arith.constant 0 : i32
    %c0_i32_1 = arith.constant 0 : i32
    return %c0_i32, %c0_i32_0 : i32, i32
  }
  func.func @transform_5(%arg0: i32) -> (i32, i32) {
    %c0_i32 = arith.constant 0 : i32
    %c0_i32_0 = arith.constant 0 : i32
    %c0_i32_1 = arith.constant 0 : i32
    return %c0_i32, %c0_i32_0 : i32, i32
  }
  func.func @transform_6(%arg0: i32) -> (i32, i32) {
    %c0_i32 = arith.constant 0 : i32
    %c0_i32_0 = arith.constant 0 : i32
    %c0_i32_1 = arith.constant 0 : i32
    return %c0_i32, %c0_i32_0 : i32, i32
  }
  func.func @transform_7(%arg0: i32) -> (i32, i32) {
    %c0_i32 = arith.constant 0 : i32
    %c0_i32_0 = arith.constant 0 : i32
    return %arg0, %c0_i32 : i32, i32
  }
}

</mosaic_0001>

<llo_original>
// kernel: tpu_custom_call.1
$region0: #{tpu_custom_call.1}
  #allocation0 [shape = 'u32[]', space=smem, size = 0x4, offset = 0x4, fixed_abs, tag = 'smem constant byte address 0x4 - core index']
  #allocation1 [shape = 'u32[72,128]{1,0:T(1,128)}', space=vmem, size = 0x9000, scoped, tag = 'internal scratch']
  %s0 = inlined_call_operand.vmem [shape: f32[2,16], index: 0, kind: input, shape index: {}]
  %s1 = inlined_call_operand.hbm [shape: f32[16,64], index: 1, kind: input, shape index: {}]
  %s2 = inlined_call_operand.vmem [shape: f32[1,64], index: 2, kind: input, shape index: {}]
  %s3 = inlined_call_operand.vmem [shape: f32[64,64], index: 3, kind: input, shape index: {}]
  %s4 = inlined_call_operand.vmem [shape: f32[1,64], index: 4, kind: input, shape index: {}]
  %s5 = inlined_call_operand.vmem [shape: f32[64,8], index: 5, kind: input, shape index: {}]
  %s6 = inlined_call_operand.vmem [shape: f32[1,8], index: 6, kind: input, shape index: {}]
  %s7 = inlined_call_operand.vmem [shape: f32[128,8], index: 7, kind: output, shape index: {}]
  %s8 = sld [smem:[#allocation0]]
  $region42: #{tpu_custom_call.1} parent=0
    _
  %s10 = ssub.s32 1, %s8
  %s11 = scalar_select 0, %s10, %s8
  $region1: #{tpu_custom_call.1} parent=0
    #allocation2 [shape = 'u8[8192]{0}', space=vmem, size = 0x2000, scoped, tag = 'input window, operand 1, single buffered']
    #allocation3 [shape = 's32[1]{0}', space=sflag, size = 0x4, scoped, tag = 'scoped memory for tpu_custom_call.1']
    %12 = vsyncpa [#allocation3], 0
    // Predicated region
    $region2: #{tpu_custom_call.1} parent=1 // pred_check
      _
    $region3: #{tpu_custom_call.1} parent=1 // pred_check_branch
      %14 = sbr.rel (0) target = $region5
    $region4: #{tpu_custom_call.1} parent=1 // pred_region
      _
    $region5: #{tpu_custom_call.1} parent=1 // pred_fallthru
      _
    // Predicated region
    $region6: #{tpu_custom_call.1} parent=1 // pred_check
      _
    $region7: #{tpu_custom_call.1} parent=1 // pred_check_branch
      %16 = sbr.rel (0) target = $region9
    $region8: #{tpu_custom_call.1} parent=1 // pred_region
      %18 = vsyncadd [#allocation3], 0
      %s19 = sshll.u32 %s1, 4
      %s20 = int_to_ptr.hbm [resolvable:$true] %s19
      %s21 = sshll.u32 [#allocation2], 4
      %s22 = int_to_ptr.vmem [resolvable:$true] %s21
      %27 = dma.hbm_to_vmem [thread:$0]  %s20, 256, %s22, [#allocation3], 128, 128, 8
    $region9: #{tpu_custom_call.1} parent=1 // pred_fallthru
      _
    // Predicated region
    $region10: #{tpu_custom_call.1} parent=1 // pred_check
      _
    $region11: #{tpu_custom_call.1} parent=1 // pred_check_branch
      %29 = sbr.rel (0) target = $region13
    $region12: #{tpu_custom_call.1} parent=1 // pred_region
      _
    $region13: #{tpu_custom_call.1} parent=1 // pred_fallthru
      _
    // Predicated region
    $region14: #{tpu_custom_call.1} parent=1 // pred_check
      _
    $region15: #{tpu_custom_call.1} parent=1 // pred_check_branch
      %31 = sbr.rel (0) target = $region17
    $region16: #{tpu_custom_call.1} parent=1 // pred_region
      _
    $region17: #{tpu_custom_call.1} parent=1 // pred_fallthru
      _
    // Predicated region
    $region18: #{tpu_custom_call.1} parent=1 // pred_check
      _
    $region19: #{tpu_custom_call.1} parent=1 // pred_check_branch
      %33 = sbr.rel (0) target = $region21
    $region20: #{tpu_custom_call.1} parent=1 // pred_region
      _
    $region21: #{tpu_custom_call.1} parent=1 // pred_fallthru
      _
    // Predicated region
    $region22: #{tpu_custom_call.1} parent=1 // pred_check
      _
    $region23: #{tpu_custom_call.1} parent=1 // pred_check_branch
      %35 = sbr.rel (0) target = $region25
    $region24: #{tpu_custom_call.1} parent=1 // pred_region
      _
    $region25: #{tpu_custom_call.1} parent=1 // pred_fallthru
      _
    // Predicated region
    $region26: #{tpu_custom_call.1} parent=1 // pred_check
      _
    $region27: #{tpu_custom_call.1} parent=1 // pred_check_branch
      %37 = sbr.rel (0) target = $region29
    $region28: #{tpu_custom_call.1} parent=1 // pred_region
      _
    $region29: #{tpu_custom_call.1} parent=1 // pred_fallthru
      _
    // Predicated region
    $region30: #{tpu_custom_call.1} parent=1 // pred_check
      _
    $region31: #{tpu_custom_call.1} parent=1 // pred_check_branch
      %39 = sbr.rel (0) target = $region33
    $region32: #{tpu_custom_call.1} parent=1 // pred_region
      %41 = dma.done [#allocation3], 256
    $region33: #{tpu_custom_call.1} parent=1 // pred_fallthru
      _
    %v42 = vld [vmem:[%s0] sm:$0xff]
    %v43 = vld [vmem:[%s0 + $0x8] sm:$0xff]
    %v44 = vld [vmem:[%s0 + $0x10] sm:$0xff]
    %v45 = vld [vmem:[%s0 + $0x18] sm:$0xff]
    %v46 = vld [vmem:[%s0 + $0x20] sm:$0xff]
    %v47 = vld [vmem:[%s0 + $0x28] sm:$0xff]
    %v48 = vld [vmem:[%s0 + $0x30] sm:$0xff]
    %v49 = vld [vmem:[%s0 + $0x38] sm:$0xff]
    %v50 = vld [vmem:[%s0 + $0x40] sm:$0xff]
    %v51 = vld [vmem:[%s0 + $0x48] sm:$0xff]
    %v52 = vld [vmem:[%s0 + $0x50] sm:$0xff]
    %v53 = vld [vmem:[%s0 + $0x58] sm:$0xff]
    %v54 = vld [vmem:[%s0 + $0x60] sm:$0xff]
    %v55 = vld [vmem:[%s0 + $0x68] sm:$0xff]
    %v56 = vld [vmem:[%s0 + $0x70] sm:$0xff]
    %v57 = vld [vmem:[%s0 + $0x78] sm:$0xff]
    %v58 = vld [vmem:[#allocation2] sm:$0xff]
    %v59 = vld [vmem:[#allocation2 + $0x8] sm:$0xff]
    %v60 = vld [vmem:[%s2] sm:$0x1]
    %v62 = vperm.slane %v60, 0
    %vm64 = vcmask 130048
    %v66 = vsel %vm64, %v42, 0
    %v69 = vsel %vm64, %v43, 0
    %v72 = vsel %vm64, %v44, 0
    %v75 = vsel %vm64, %v45, 0
    %v78 = vsel %vm64, %v46, 0
    %v81 = vsel %vm64, %v47, 0
    %v84 = vsel %vm64, %v48, 0
    %v87 = vsel %vm64, %v49, 0
    %v90 = vsel %vm64, %v50, 0
    %v93 = vsel %vm64, %v51, 0
    %v96 = vsel %vm64, %v52, 0
    %v99 = vsel %vm64, %v53, 0
    %v102 = vsel %vm64, %v54, 0
    %v105 = vsel %vm64, %v55, 0
    %v108 = vsel %vm64, %v56, 0
    %v111 = vsel %vm64, %v57, 0
    %113 = vmatpush.msra.mxu0 0.0
    %114 = vmatpush.msra.mxu0 0.0
    %115 = vmatpush.msra.mxu0 0.0
    %116 = vmatpush.msra.mxu0 0.0
    %117 = vmatpush.msra.mxu0 0.0
    %118 = vmatpush.msra.mxu0 0.0
    %119 = vmatpush.msra.mxu0 0.0
    %120 = vmatpush.msra.mxu0 0.0
    %121 = vmatpush.msra.mxu0 0.0
    %122 = vmatpush.msra.mxu0 0.0
    %123 = vmatpush.msra.mxu0 0.0
    %124 = vmatpush.msra.mxu0 0.0
    %125 = vmatpush.msra.mxu0 0.0
    %126 = vmatpush.msra.mxu0 0.0
    %127 = vmatpush.msra.mxu0 %v59
    %128 = vmatpush.msra.mxu0 %v58
    %129 = vmatmul.f32.gmra.mxu0 %v66
    %v130 = vpop.f32.mrf.mxu0
    %v131 = vadd.f32 %v62, %v130
    %132 = vmatmul.f32.gmra.mxu0 %v69
    %v133 = vpop.f32.mrf.mxu0
    %v134 = vadd.f32 %v62, %v133
    %135 = vmatmul.f32.gmra.mxu0 %v72
    %v136 = vpop.f32.mrf.mxu0
    %v137 = vadd.f32 %v62, %v136
    %138 = vmatmul.f32.gmra.mxu0 %v75
    %v139 = vpop.f32.mrf.mxu0
    %v140 = vadd.f32 %v62, %v139
    %141 = vmatmul.f32.gmra.mxu0 %v78
    %v142 = vpop.f32.mrf.mxu0
    %v143 = vadd.f32 %v62, %v142
    %144 = vmatmul.f32.gmra.mxu0 %v81
    %v145 = vpop.f32.mrf.mxu0
    %v146 = vadd.f32 %v62, %v145
    %147 = vmatmul.f32.gmra.mxu0 %v84
    %v148 = vpop.f32.mrf.mxu0
    %v149 = vadd.f32 %v62, %v148
    %150 = vmatmul.f32.gmra.mxu0 %v87
    %v151 = vpop.f32.mrf.mxu0
    %v152 = vadd.f32 %v62, %v151
    %153 = vmatmul.f32.gmra.mxu0 %v90
    %v154 = vpop.f32.mrf.mxu0
    %v155 = vadd.f32 %v62, %v154
    %156 = vmatmul.f32.gmra.mxu0 %v93
    %v157 = vpop.f32.mrf.mxu0
    %v158 = vadd.f32 %v62, %v157
    %159 = vmatmul.f32.gmra.mxu0 %v96
    %v160 = vpop.f32.mrf.mxu0
    %v161 = vadd.f32 %v62, %v160
    %162 = vmatmul.f32.gmra.mxu0 %v99
    %v163 = vpop.f32.mrf.mxu0
    %v164 = vadd.f32 %v62, %v163
    %165 = vmatmul.f32.gmra.mxu0 %v102
    %v166 = vpop.f32.mrf.mxu0
    %v167 = vadd.f32 %v62, %v166
    %168 = vmatmul.f32.gmra.mxu0 %v105
    %v169 = vpop.f32.mrf.mxu0
    %v170 = vadd.f32 %v62, %v169
    %171 = vmatmul.f32.gmra.mxu0 %v108
    %v172 = vpop.f32.mrf.mxu0
    %v173 = vadd.f32 %v62, %v172
    %174 = vmatmul.f32.gmra.mxu0 %v111
    %v175 = vpop.f32.mrf.mxu0
    %v176 = vadd.f32 %v62, %v175
    %177 = vdwg.mxu0
    %v178 = vmax.f32 %v131, 0.0
    %v179 = vmax.f32 %v134, 0.0
    %v180 = vmax.f32 %v137, 0.0
    %v181 = vmax.f32 %v140, 0.0
    %v182 = vmax.f32 %v143, 0.0
    %v183 = vmax.f32 %v146, 0.0
    %v184 = vmax.f32 %v149, 0.0
    %v185 = vmax.f32 %v152, 0.0
    %v186 = vmax.f32 %v155, 0.0
    %v187 = vmax.f32 %v158, 0.0
    %v188 = vmax.f32 %v161, 0.0
    %v189 = vmax.f32 %v164, 0.0
    %v190 = vmax.f32 %v167, 0.0
    %v191 = vmax.f32 %v170, 0.0
    %v192 = vmax.f32 %v173, 0.0
    %v193 = vmax.f32 %v176, 0.0
    %v194 = vld [vmem:[%s3] sm:$0xff]
    %v195 = vld [vmem:[%s3 + $0x8] sm:$0xff]
    %v196 = vld [vmem:[%s3 + $0x10] sm:$0xff]
    %v197 = vld [vmem:[%s3 + $0x18] sm:$0xff]
    %v198 = vld [vmem:[%s3 + $0x20] sm:$0xff]
    %v199 = vld [vmem:[%s3 + $0x28] sm:$0xff]
    %v200 = vld [vmem:[%s3 + $0x30] sm:$0xff]
    %v201 = vld [vmem:[%s3 + $0x38] sm:$0xff]
    %v202 = vld [vmem:[%s4] sm:$0x1]
    %v204 = vperm.slane %v202, 0
    %vm206 = vcmask 523264
    %v208 = vsel %vm206, %v178, 0
    %v211 = vsel %vm206, %v179, 0
    %v214 = vsel %vm206, %v180, 0
    %v217 = vsel %vm206, %v181, 0
    %v220 = vsel %vm206, %v182, 0
    %v223 = vsel %vm206, %v183, 0
    %v226 = vsel %vm206, %v184, 0
    %v229 = vsel %vm206, %v185, 0
    %v232 = vsel %vm206, %v186, 0
    %v235 = vsel %vm206, %v187, 0
    %v238 = vsel %vm206, %v188, 0
    %v241 = vsel %vm206, %v189, 0
    %v244 = vsel %vm206, %v190, 0
    %v247 = vsel %vm206, %v191, 0
    %v250 = vsel %vm206, %v192, 0
    %v253 = vsel %vm206, %v193, 0
    %255 = vmatpush.msra.mxu0 0.0
    %256 = vmatpush.msra.mxu0 0.0
    %257 = vmatpush.msra.mxu0 0.0
    %258 = vmatpush.msra.mxu0 0.0
    %259 = vmatpush.msra.mxu0 0.0
    %260 = vmatpush.msra.mxu0 0.0
    %261 = vmatpush.msra.mxu0 0.0
    %262 = vmatpush.msra.mxu0 0.0
    %263 = vmatpush.msra.mxu0 %v201
    %264 = vmatpush.msra.mxu0 %v200
    %265 = vmatpush.msra.mxu0 %v199
    %266 = vmatpush.msra.mxu0 %v198
    %267 = vmatpush.msra.mxu0 %v197
    %268 = vmatpush.msra.mxu0 %v196
    %269 = vmatpush.msra.mxu0 %v195
    %270 = vmatpush.msra.mxu0 %v194
    %271 = vmatmul.f32.gmra.mxu0 %v208
    %v272 = vpop.f32.mrf.mxu0
    %v273 = vadd.f32 %v204, %v272
    %274 = vmatmul.f32.gmra.mxu0 %v211
    %v275 = vpop.f32.mrf.mxu0
    %v276 = vadd.f32 %v204, %v275
    %277 = vmatmul.f32.gmra.mxu0 %v214
    %v278 = vpop.f32.mrf.mxu0
    %v279 = vadd.f32 %v204, %v278
    %280 = vmatmul.f32.gmra.mxu0 %v217
    %v281 = vpop.f32.mrf.mxu0
    %v282 = vadd.f32 %v204, %v281
    %283 = vmatmul.f32.gmra.mxu0 %v220
    %v284 = vpop.f32.mrf.mxu0
    %v285 = vadd.f32 %v204, %v284
    %286 = vmatmul.f32.gmra.mxu0 %v223
    %v287 = vpop.f32.mrf.mxu0
    %v288 = vadd.f32 %v204, %v287
    %289 = vmatmul.f32.gmra.mxu0 %v226
    %v290 = vpop.f32.mrf.mxu0
    %v291 = vadd.f32 %v204, %v290
    %292 = vmatmul.f32.gmra.mxu0 %v229
    %v293 = vpop.f32.mrf.mxu0
    %v294 = vadd.f32 %v204, %v293
    %295 = vmatmul.f32.gmra.mxu0 %v232
    %v296 = vpop.f32.mrf.mxu0
    %v297 = vadd.f32 %v204, %v296
    %298 = vmatmul.f32.gmra.mxu0 %v235
    %v299 = vpop.f32.mrf.mxu0
    %v300 = vadd.f32 %v204, %v299
    %301 = vmatmul.f32.gmra.mxu0 %v238
    %v302 = vpop.f32.mrf.mxu0
    %v303 = vadd.f32 %v204, %v302
    %304 = vmatmul.f32.gmra.mxu0 %v241
    %v305 = vpop.f32.mrf.mxu0
    %v306 = vadd.f32 %v204, %v305
    %307 = vmatmul.f32.gmra.mxu0 %v244
    %v308 = vpop.f32.mrf.mxu0
    %v309 = vadd.f32 %v204, %v308
    %310 = vmatmul.f32.gmra.mxu0 %v247
    %v311 = vpop.f32.mrf.mxu0
    %v312 = vadd.f32 %v204, %v311
    %313 = vmatmul.f32.gmra.mxu0 %v250
    %v314 = vpop.f32.mrf.mxu0
    %v315 = vadd.f32 %v204, %v314
    %316 = vmatmul.f32.gmra.mxu0 %v253
    %v317 = vpop.f32.mrf.mxu0
    %v318 = vadd.f32 %v204, %v317
    %319 = vdwg.mxu0
    %v320 = vmax.f32 %v273, 0.0
    %v321 = vmax.f32 %v276, 0.0
    %v322 = vmax.f32 %v279, 0.0
    %v323 = vmax.f32 %v282, 0.0
    %v324 = vmax.f32 %v285, 0.0
    %v325 = vmax.f32 %v288, 0.0
    %v326 = vmax.f32 %v291, 0.0
    %v327 = vmax.f32 %v294, 0.0
    %v328 = vmax.f32 %v297, 0.0
    %v329 = vmax.f32 %v300, 0.0
    %v330 = vmax.f32 %v303, 0.0
    %v331 = vmax.f32 %v306, 0.0
    %v332 = vmax.f32 %v309, 0.0
    %v333 = vmax.f32 %v312, 0.0
    %v334 = vmax.f32 %v315, 0.0
    %v335 = vmax.f32 %v318, 0.0
    %v336 = vld [vmem:[%s5] sm:$0xff]
    %v337 = vld [vmem:[%s5 + $0x8] sm:$0xff]
    %v338 = vld [vmem:[%s5 + $0x10] sm:$0xff]
    %v339 = vld [vmem:[%s5 + $0x18] sm:$0xff]
    %v340 = vld [vmem:[%s5 + $0x20] sm:$0xff]
    %v341 = vld [vmem:[%s5 + $0x28] sm:$0xff]
    %v342 = vld [vmem:[%s5 + $0x30] sm:$0xff]
    %v343 = vld [vmem:[%s5 + $0x38] sm:$0xff]
    %v344 = vld [vmem:[%s6] sm:$0x1]
    %v346 = vperm.slane %v344, 0
    %v349 = vsel %vm206, %v320, 0
    %v352 = vsel %vm206, %v321, 0
    %v355 = vsel %vm206, %v322, 0
    %v358 = vsel %vm206, %v323, 0
    %v361 = vsel %vm206, %v324, 0
    %v364 = vsel %vm206, %v325, 0
    %v367 = vsel %vm206, %v326, 0
    %v370 = vsel %vm206, %v327, 0
    %v373 = vsel %vm206, %v328, 0
    %v376 = vsel %vm206, %v329, 0
    %v379 = vsel %vm206, %v330, 0
    %v382 = vsel %vm206, %v331, 0
    %v385 = vsel %vm206, %v332, 0
    %v388 = vsel %vm206, %v333, 0
    %v391 = vsel %vm206, %v334, 0
    %v394 = vsel %vm206, %v335, 0
    %396 = vmatpush.msra.mxu0 0.0
    %397 = vmatpush.msra.mxu0 0.0
    %398 = vmatpush.msra.mxu0 0.0
    %399 = vmatpush.msra.mxu0 0.0
    %400 = vmatpush.msra.mxu0 0.0
    %401 = vmatpush.msra.mxu0 0.0
    %402 = vmatpush.msra.mxu0 0.0
    %403 = vmatpush.msra.mxu0 0.0
    %404 = vmatpush.msra.mxu0 %v343
    %405 = vmatpush.msra.mxu0 %v342
    %406 = vmatpush.msra.mxu0 %v341
    %407 = vmatpush.msra.mxu0 %v340
    %408 = vmatpush.msra.mxu0 %v339
    %409 = vmatpush.msra.mxu0 %v338
    %410 = vmatpush.msra.mxu0 %v337
    %411 = vmatpush.msra.mxu0 %v336
    %412 = vmatmul.f32.gmra.mxu0 %v349
    %v413 = vpop.f32.mrf.mxu0
    %v414 = vadd.f32 %v346, %v413
    %415 = vmatmul.f32.gmra.mxu0 %v352
    %v416 = vpop.f32.mrf.mxu0
    %v417 = vadd.f32 %v346, %v416
    %418 = vmatmul.f32.gmra.mxu0 %v355
    %v419 = vpop.f32.mrf.mxu0
    %v420 = vadd.f32 %v346, %v419
    %421 = vmatmul.f32.gmra.mxu0 %v358
    %v422 = vpop.f32.mrf.mxu0
    %v423 = vadd.f32 %v346, %v422
    %424 = vmatmul.f32.gmra.mxu0 %v361
    %v425 = vpop.f32.mrf.mxu0
    %v426 = vadd.f32 %v346, %v425
    %427 = vmatmul.f32.gmra.mxu0 %v364
    %v428 = vpop.f32.mrf.mxu0
    %v429 = vadd.f32 %v346, %v428
    %430 = vmatmul.f32.gmra.mxu0 %v367
    %v431 = vpop.f32.mrf.mxu0
    %v432 = vadd.f32 %v346, %v431
    %433 = vmatmul.f32.gmra.mxu0 %v370
    %v434 = vpop.f32.mrf.mxu0
    %v435 = vadd.f32 %v346, %v434
    %436 = vmatmul.f32.gmra.mxu0 %v373
    %v437 = vpop.f32.mrf.mxu0
    %v438 = vadd.f32 %v346, %v437
    %439 = vmatmul.f32.gmra.mxu0 %v376
    %v440 = vpop.f32.mrf.mxu0
    %v441 = vadd.f32 %v346, %v440
    %442 = vmatmul.f32.gmra.mxu0 %v379
    %v443 = vpop.f32.mrf.mxu0
    %v444 = vadd.f32 %v346, %v443
    %445 = vmatmul.f32.gmra.mxu0 %v382
    %v446 = vpop.f32.mrf.mxu0
    %v447 = vadd.f32 %v346, %v446
    %448 = vmatmul.f32.gmra.mxu0 %v385
    %v449 = vpop.f32.mrf.mxu0
    %v450 = vadd.f32 %v346, %v449
    %451 = vmatmul.f32.gmra.mxu0 %v388
    %v452 = vpop.f32.mrf.mxu0
    %v453 = vadd.f32 %v346, %v452
    %454 = vmatmul.f32.gmra.mxu0 %v391
    %v455 = vpop.f32.mrf.mxu0
    %v456 = vadd.f32 %v346, %v455
    %457 = vmatmul.f32.gmra.mxu0 %v394
    %v458 = vpop.f32.mrf.mxu0
    %v459 = vadd.f32 %v346, %v458
    %460 = vdwg.mxu0
    %v461 = vtanh.pop %v414
    %v462 = vtanh.pop %v417
    %v463 = vtanh.pop %v420
    %v464 = vtanh.pop %v423
    %v465 = vtanh.pop %v426
    %v466 = vtanh.pop %v429
    %v467 = vtanh.pop %v432
    %v468 = vtanh.pop %v435
    %v469 = vtanh.pop %v438
    %v470 = vtanh.pop %v441
    %v471 = vtanh.pop %v444
    %v472 = vtanh.pop %v447
    %v473 = vtanh.pop %v450
    %v474 = vtanh.pop %v453
    %v475 = vtanh.pop %v456
    %v476 = vtanh.pop %v459
    %vm477 = vcmask 64512
    %478 = vst.msk [vmem:[%s7] sm:$0xff] %vm477, %v461
    %479 = vst.msk [vmem:[%s7 + $0x8] sm:$0xff] %vm477, %v462
    %480 = vst.msk [vmem:[%s7 + $0x10] sm:$0xff] %vm477, %v463
    %481 = vst.msk [vmem:[%s7 + $0x18] sm:$0xff] %vm477, %v464
    %482 = vst.msk [vmem:[%s7 + $0x20] sm:$0xff] %vm477, %v465
    %483 = vst.msk [vmem:[%s7 + $0x28] sm:$0xff] %vm477, %v466
    %484 = vst.msk [vmem:[%s7 + $0x30] sm:$0xff] %vm477, %v467
    %485 = vst.msk [vmem:[%s7 + $0x38] sm:$0xff] %vm477, %v468
    %486 = vst.msk [vmem:[%s7 + $0x40] sm:$0xff] %vm477, %v469
    %487 = vst.msk [vmem:[%s7 + $0x48] sm:$0xff] %vm477, %v470
    %488 = vst.msk [vmem:[%s7 + $0x50] sm:$0xff] %vm477, %v471
    %489 = vst.msk [vmem:[%s7 + $0x58] sm:$0xff] %vm477, %v472
    %490 = vst.msk [vmem:[%s7 + $0x60] sm:$0xff] %vm477, %v473
    %491 = vst.msk [vmem:[%s7 + $0x68] sm:$0xff] %vm477, %v474
    %492 = vst.msk [vmem:[%s7 + $0x70] sm:$0xff] %vm477, %v475
    %493 = vst.msk [vmem:[%s7 + $0x78] sm:$0xff] %vm477, %v476
    // Predicated region
    $region34: #{tpu_custom_call.1} parent=1 // pred_check
      _
    $region35: #{tpu_custom_call.1} parent=1 // pred_check_branch
      %495 = sbr.rel (0) target = $region37
    $region36: #{tpu_custom_call.1} parent=1 // pred_region
      _
    $region37: #{tpu_custom_call.1} parent=1 // pred_fallthru
      _
    // Predicated region
    $region38: #{tpu_custom_call.1} parent=1 // pred_check
      _
    $region39: #{tpu_custom_call.1} parent=1 // pred_check_branch
      %497 = sbr.rel (0) target = $region41
    $region40: #{tpu_custom_call.1} parent=1 // pred_region
      _
    $region41: #{tpu_custom_call.1} parent=1 // pred_fallthru
      _
    %498 = vsyncpa [#allocation3], 1

</llo_original>
